<compile_context>
chip_gen: v6e
topology: v6e:2x2x1
jax: 0.10.0
libtpu: 0.0.40
codegen_flags: <defaults>
</compile_context>

<pallas_src>
import jax
import jax.numpy as jnp
from jax.experimental import pallas as pl
from jax.experimental.pallas import tpu as pltpu

_LANES = 128
_SUBLANES = 8
_VREG = _LANES * _SUBLANES  # 1024 f32 elements per vreg


def _masked_l1_kernel(x_ref, t_ref, m_ref, o_ref):
    # x_ref / t_ref: (1, C, chunk); m_ref: (1, 1, chunk); o_ref: (1, 8, 128)
    chunk_id = pl.program_id(1)

    # Reset this n's partial-sum block at the first chunk.
    @pl.when(chunk_id == 0)
    def _():
        o_ref[...] = jnp.zeros_like(o_ref)

    x = x_ref[...].astype(jnp.float32)
    t = t_ref[...].astype(jnp.float32)
    m = m_ref[...].astype(jnp.float32)          # broadcast over C below

    d = jnp.abs((x - t) * m)                    # (1, C, chunk)
    # Fold the block onto a single vreg worth of partial sums: pure elementwise
    # (VPU) adds of (8,128) tiles; no scalar cross-lane reduce per step.
    partial = d.reshape(-1, _SUBLANES, _LANES).sum(axis=0)   # (8, 128)
    o_ref[...] += partial[None, :, :]


def masked_l1_loss(x, target, mask, *, block_bytes=1 << 20):
    """x, target: (N, C, H, W); mask: (N, 1, H, W). Returns scalar f32 loss."""
    N, C, H, W = x.shape
    assert target.shape == (N, C, H, W)
    assert mask.shape == (N, 1, H, W)
    total_elems = N * C * H * W

    # Lane-dense flattening + zero-pad HW up to a multiple of 1024.
    hw = H * W
    pad = (-hw) % _VREG
    x3 = x.reshape(N, C, hw)
    t3 = target.reshape(N, C, hw)
    m3 = mask.reshape(N, 1, hw)
    if pad:
        cfg = ((0, 0), (0, 0), (0, pad))
        x3 = jnp.pad(x3, cfg)
        t3 = jnp.pad(t3, cfg)
        m3 = jnp.pad(m3, cfg)
    hw_pad = hw + pad

    # Pick a spatial chunk (multiple of 1024) so one x/t block is <= block_bytes.
    itemsize = jnp.dtype(x3.dtype).itemsize
    chunk = hw_pad
    num_chunks = 1
    while C * chunk * itemsize > block_bytes and chunk % (2 * _VREG) == 0:
        chunk //= 2
        num_chunks *= 2

    partials = pl.pallas_call(
        _masked_l1_kernel,
        out_shape=jax.ShapeDtypeStruct((N, _SUBLANES, _LANES), jnp.float32),
        grid_spec=pltpu.PrefetchScalarGridSpec(
            num_scalar_prefetch=0,
            grid=(N, num_chunks),
            in_specs=[
                pl.BlockSpec((1, C, chunk), lambda n, c: (n, 0, c)),  # input
                pl.BlockSpec((1, C, chunk), lambda n, c: (n, 0, c)),  # target
                pl.BlockSpec((1, 1, chunk), lambda n, c: (n, 0, c)),  # mask (1x per n-chunk)
            ],
            out_specs=pl.BlockSpec((1, _SUBLANES, _LANES), lambda n, c: (n, 0, 0)),
        ),
        compiler_params=pltpu.CompilerParams(
            dimension_semantics=("parallel", "arbitrary"),
            vmem_limit_bytes=32 << 20,
        ),
    )(x3, t3, m3)

    # Single final cross-lane reduce + mean over the TRUE element count.
    return jnp.sum(partials) / jnp.float32(total_elems)


if __name__ == "__main__":
    key = jax.random.PRNGKey(0)
    k1, k2, k3 = jax.random.split(key, 3)

    N, C, H, W = 2, 4, 16, 16
    x = jax.random.normal(k1, (N, C, H, W), dtype=jnp.float32)
    target = jax.random.normal(k2, (N, C, H, W), dtype=jnp.float32)
    # Binary mask, shape (N, 1, H, W) like the PyTorch module expects.
    mask = (jax.random.uniform(k3, (N, 1, H, W)) > 0.5).astype(jnp.float32)

    loss = jax.block_until_ready(masked_l1_loss(x, target, mask))

    # Pure-JAX reference for sanity.
    mask_e = jnp.broadcast_to(mask, (N, C, H, W))
    ref = jnp.mean(jnp.abs(x * mask_e - target * mask_e))
    assert jnp.allclose(loss, ref, rtol=1e-5, atol=1e-6), (loss, ref)

    print("KERNEL_OK")
</pallas_src>

<mosaic_0001>
module attributes {stable_mosaic.version = 11 : i64} {
  func.func @_masked_l1_kernel(%arg0: i32, %arg1: i32, %arg2: memref<1x4x1024xf32, #tpu.memory_space<vmem>>, %arg3: memref<1x4x1024xf32, #tpu.memory_space<vmem>>, %arg4: memref<1x1x1024xf32, #tpu.memory_space<vmem>>, %arg5: memref<1x8x128xf32, #tpu.memory_space<vmem>>) attributes {dimension_semantics = [#tpu.dimension_semantics<parallel>, #tpu.dimension_semantics<arbitrary>], iteration_bounds = array<i64: 2, 1>, scalar_prefetch = 0 : i64, scratch_operands = 0 : i64, tpu.core_type = #tpu.core_type<tc>, window_params = [{transform_indices = @transform_0, window_bounds = array<i64: 1, 4, 1024>}, {transform_indices = @transform_1, window_bounds = array<i64: 1, 4, 1024>}, {transform_indices = @transform_2, window_bounds = array<i64: 1, 1, 1024>}, {transform_indices = @transform_3, window_bounds = array<i64: 1, 8, 128>}]} {
    %c0_i32 = arith.constant 0 : i32
    %0 = arith.cmpi eq, %arg1, %c0_i32 : i32
    %1 = arith.extui %0 : i1 to i32
    %c0_i32_0 = arith.constant 0 : i32
    %2 = arith.cmpi ne, %1, %c0_i32_0 : i32
    scf.if %2 {
      %cst_15 = arith.constant 0.000000e+00 : f32
      %16 = vector.broadcast %cst_15 : f32 to vector<1x8x128xf32>
      %c0_16 = arith.constant 0 : index
      %c0_17 = arith.constant 0 : index
      %c0_18 = arith.constant 0 : index
      %17 = vector.load %arg5[%c0_16, %c0_17, %c0_18] : memref<1x8x128xf32, #tpu.memory_space<vmem>>, vector<1x8x128xf32>
      tpu.vector_store %arg5[%c0_16, %c0_17, %c0_18], %16 {strides = array<i32>} : memref<1x8x128xf32, #tpu.memory_space<vmem>>, vector<1x8x128xf32>,
    } else {
    }
    %c0 = arith.constant 0 : index
    %c0_1 = arith.constant 0 : index
    %c0_2 = arith.constant 0 : index
    %3 = vector.load %arg2[%c0, %c0_1, %c0_2] : memref<1x4x1024xf32, #tpu.memory_space<vmem>>, vector<1x4x1024xf32>
    %c0_3 = arith.constant 0 : index
    %c0_4 = arith.constant 0 : index
    %c0_5 = arith.constant 0 : index
    %4 = vector.load %arg3[%c0_3, %c0_4, %c0_5] : memref<1x4x1024xf32, #tpu.memory_space<vmem>>, vector<1x4x1024xf32>
    %c0_6 = arith.constant 0 : index
    %c0_7 = arith.constant 0 : index
    %c0_8 = arith.constant 0 : index
    %5 = vector.load %arg4[%c0_6, %c0_7, %c0_8] : memref<1x1x1024xf32, #tpu.memory_space<vmem>>, vector<1x1x1024xf32>
    %6 = arith.subf %3, %4 : vector<1x4x1024xf32>
    %7 = vector.broadcast %5 : vector<1x1x1024xf32> to vector<1x4x1024xf32>
    %8 = arith.mulf %6, %7 : vector<1x4x1024xf32>
    %9 = math.absf %8 : vector<1x4x1024xf32>
    %10 = vector.shape_cast %9 : vector<1x4x1024xf32> to vector<4x8x128xf32>
    %cst = arith.constant dense<0.000000e+00> : vector<8x128xf32>
    %11 = vector.multi_reduction <add>, %10, %cst [0] : vector<4x8x128xf32> to vector<8x128xf32>
    %c0_9 = arith.constant 0 : index
    %c0_10 = arith.constant 0 : index
    %c0_11 = arith.constant 0 : index
    %12 = vector.load %arg5[%c0_9, %c0_10, %c0_11] : memref<1x8x128xf32, #tpu.memory_space<vmem>>, vector<1x8x128xf32>
    %13 = vector.shape_cast %11 : vector<8x128xf32> to vector<1x8x128xf32>
    %14 = arith.addf %12, %13 : vector<1x8x128xf32>
    %c0_12 = arith.constant 0 : index
    %c0_13 = arith.constant 0 : index
    %c0_14 = arith.constant 0 : index
    %15 = vector.load %arg5[%c0_12, %c0_13, %c0_14] : memref<1x8x128xf32, #tpu.memory_space<vmem>>, vector<1x8x128xf32>
    tpu.vector_store %arg5[%c0_12, %c0_13, %c0_14], %14 {strides = array<i32>} : memref<1x8x128xf32, #tpu.memory_space<vmem>>, vector<1x8x128xf32>,
    return
  }
  func.func @transform_0(%arg0: i32, %arg1: i32) -> (i32, i32, i32) {
    %c0_i32 = arith.constant 0 : i32
    %c0_i32_0 = arith.constant 0 : i32
    return %arg0, %c0_i32, %arg1 : i32, i32, i32
  }
  func.func @transform_1(%arg0: i32, %arg1: i32) -> (i32, i32, i32) {
    %c0_i32 = arith.constant 0 : i32
    %c0_i32_0 = arith.constant 0 : i32
    return %arg0, %c0_i32, %arg1 : i32, i32, i32
  }
  func.func @transform_2(%arg0: i32, %arg1: i32) -> (i32, i32, i32) {
    %c0_i32 = arith.constant 0 : i32
    %c0_i32_0 = arith.constant 0 : i32
    return %arg0, %c0_i32, %arg1 : i32, i32, i32
  }
  func.func @transform_3(%arg0: i32, %arg1: i32) -> (i32, i32, i32) {
    %c0_i32 = arith.constant 0 : i32
    %c0_i32_0 = arith.constant 0 : i32
    %c0_i32_1 = arith.constant 0 : i32
    return %arg0, %c0_i32, %c0_i32_0 : i32, i32, i32
  }
}

</mosaic_0001>

<llo_original>
// kernel: tpu_custom_call.1
$region0: #{tpu_custom_call.1}
  #allocation0 [shape = 'u32[]', space=smem, size = 0x4, offset = 0x4, fixed_abs, tag = 'smem constant byte address 0x4 - core index']
  #allocation1 [shape = 'u32[144,128]{1,0:T(1,128)}', space=vmem, size = 0x12000, scoped, tag = 'internal scratch']
  %s0 = inlined_call_operand.hbm [shape: f32[2,4,1024], index: 0, kind: input, shape index: {}]
  %s1 = inlined_call_operand.hbm [shape: f32[2,4,1024], index: 1, kind: input, shape index: {}]
  %s2 = inlined_call_operand.hbm [shape: f32[2,1,1024], index: 2, kind: input, shape index: {}]
  %s3 = inlined_call_operand.hbm [shape: f32[2,8,128], index: 3, kind: output, shape index: {}]
  %s4 = sld [smem:[#allocation0]]
  $region61: #{tpu_custom_call.1} parent=0
    _
  %s6 = ssub.s32 1, %s4
  %s7 = scalar_select 0, %s6, %s4
  $region1: #{tpu_custom_call.1} parent=0
    #allocation2 [shape = 'u8[32768]{0}', space=vmem, size = 0x8000, scoped, tag = 'input window, operand 0']
    #allocation3 [shape = 's32[2]{0}', space=sflag, size = 0x8, scoped, tag = 'scoped memory for tpu_custom_call.1']
    #allocation4 [shape = 's32[2]{0}', space=sflag, size = 0x8, scoped, tag = 'scoped memory for tpu_custom_call.1']
    #allocation5 [shape = 'u8[32768]{0}', space=vmem, size = 0x8000, scoped, tag = 'input window, operand 1']
    #allocation6 [shape = 's32[2]{0}', space=sflag, size = 0x8, scoped, tag = 'scoped memory for tpu_custom_call.1']
    #allocation7 [shape = 'u8[8192]{0}', space=vmem, size = 0x2000, scoped, tag = 'input window, operand 2']
    #allocation8 [shape = 'u8[8192]{0}', space=vmem, size = 0x2000, scoped, tag = 'output window, operand 0']
    %8 = vsyncpa [#allocation3], 0
    %s9 = scalar_lea.sflag [#allocation3], 1
    %10 = vsyncpa %s9, 0
    %11 = vsyncpa [#allocation6], 0
    %s12 = scalar_lea.sflag [#allocation6], 1
    %13 = vsyncpa %s12, 0
    %14 = vsyncpa [#allocation4], 0
    %s15 = scalar_lea.sflag [#allocation4], 1
    %16 = vsyncpa %s15, 0
    loop: start=0, step=1, limit=4
    $region2: #{tpu_custom_call.1} parent=1 // loop_pre_header
      _
    $region3: #{tpu_custom_call.1} parent=1 // loop_header
      %s18 = sphi 0, %s22
      %p19 = scmp.ge.s32.totalorder %s18, 4
      %s25 = sphi 0, %s37
      %s26 = sphi 0, %s33
      %s27 = sphi 0, %s25
      %s28 = sphi 0, %s26
      %s29 = sphi 0, %s27
      %s30 = sphi 0, %s28
      %s42 = sphi 0, %s44
      %s45 = sphi 0, %s42
      %s46 = sphi 0, %s45
      %s62 = sphi 0, %s46
      %s70 = sphi 0, %s72
      %s73 = sphi 0, %s70
      %s74 = sphi 0, %s73
      %s90 = sphi 0, %s74
      %s98 = sphi 0, %s100
      %s101 = sphi 0, %s98
      %s102 = sphi 0, %s101
      %s118 = sphi 0, %s102
      %s124 = sphi 0, %s126
      %s127 = sphi 0, %s124
      %s128 = sphi 0, %s127
      %s144 = sphi 0, %s128
    $region4: #{tpu_custom_call.1} parent=1 // loop_header_branch
      %21 = sbr.rel (%p19) target = $region8
    $region5: #{tpu_custom_call.1} parent=1 // loop_body
      %s23 = ssub.s32 %s18, 1
      %s24 = ssub.s32 %s18, 2
      %s31 = sadd.s32 1, %s26
      %p32 = scmp.ge.s32.totalorder %s31, 1
      %s33 = scalar_select %p32, 0, %s31
      %s34 = sadd.s32 1, %s25
      %s35 = scalar_select %p32, %s34, %s25
      %p36 = scmp.ge.s32.totalorder %s35, 2
      %s37 = scalar_select %p36, 0, %s35
      %s38 = ssub.s32 %s25, %s37
      %s39 = ssub.s32 %s26, %s33
      %s40 = sor.u32 %s38, %s39
      %p41 = scmp.eq.s32.totalorder %s40, 0
      %s43 = sadd.s32 %s42, 1
      %s44 = scalar_select %p41, %s42, %s43
      %p47 = pneg %p41
      %p48 = scmp.eq.s32.totalorder %s18, 1
      %p49 = por %p47, %p48
      %p50 = scmp.ne.s32.totalorder %s42, %s45
      %p51 = scmp.eq.s32.totalorder %s18, 0
      %p52 = por %p50, %p51
      %p53 = scmp.ne.s32.totalorder %s42, %s45
      %p54 = scmp.eq.s32.totalorder %s23, 1
      %p55 = por %p53, %p54
      %p56 = scmp.ne.s32.totalorder %s45, %s46
      %p57 = scmp.eq.s32.totalorder %s23, 0
      %p58 = por %p56, %p57
      %p59 = scmp.ne.s32.totalorder %s45, %s46
      %p60 = scmp.eq.s32.totalorder %s24, 1
      %p61 = por %p59, %p60
      %p63 = scmp.ne.s32.totalorder %s46, %s62
      %p64 = scmp.eq.s32.totalorder %s24, 0
      %p65 = por %p63, %p64
      %s66 = ssub.s32 %s25, %s37
      %s67 = ssub.s32 %s26, %s33
      %s68 = sor.u32 %s66, %s67
      %p69 = scmp.eq.s32.totalorder %s68, 0
      %s71 = sadd.s32 %s70, 1
      %s72 = scalar_select %p69, %s70, %s71
      %p75 = pneg %p69
      %p76 = scmp.eq.s32.totalorder %s18, 1
      %p77 = por %p75, %p76
      %p78 = scmp.ne.s32.totalorder %s70, %s73
      %p79 = scmp.eq.s32.totalorder %s18, 0
      %p80 = por %p78, %p79
      %p81 = scmp.ne.s32.totalorder %s70, %s73
      %p82 = scmp.eq.s32.totalorder %s23, 1
      %p83 = por %p81, %p82
      %p84 = scmp.ne.s32.totalorder %s73, %s74
      %p85 = scmp.eq.s32.totalorder %s23, 0
      %p86 = por %p84, %p85
      %p87 = scmp.ne.s32.totalorder %s73, %s74
      %p88 = scmp.eq.s32.totalorder %s24, 1
      %p89 = por %p87, %p88
      %p91 = scmp.ne.s32.totalorder %s74, %s90
      %p92 = scmp.eq.s32.totalorder %s24, 0
      %p93 = por %p91, %p92
      %s94 = ssub.s32 %s25, %s37
      %s95 = ssub.s32 %s26, %s33
      %s96 = sor.u32 %s94, %s95
      %p97 = scmp.eq.s32.totalorder %s96, 0
      %s99 = sadd.s32 %s98, 1
      %s100 = scalar_select %p97, %s98, %s99
      %p103 = pneg %p97
      %p104 = scmp.eq.s32.totalorder %s18, 1
      %p105 = por %p103, %p104
      %p106 = scmp.ne.s32.totalorder %s98, %s101
      %p107 = scmp.eq.s32.totalorder %s18, 0
      %p108 = por %p106, %p107
      %p109 = scmp.ne.s32.totalorder %s98, %s101
      %p110 = scmp.eq.s32.totalorder %s23, 1
      %p111 = por %p109, %p110
      %p112 = scmp.ne.s32.totalorder %s101, %s102
      %p113 = scmp.eq.s32.totalorder %s23, 0
      %p114 = por %p112, %p113
      %p115 = scmp.ne.s32.totalorder %s101, %s102
      %p116 = scmp.eq.s32.totalorder %s24, 1
      %p117 = por %p115, %p116
      %p119 = scmp.ne.s32.totalorder %s102, %s118
      %p120 = scmp.eq.s32.totalorder %s24, 0
      %p121 = por %p119, %p120
      %s122 = ssub.s32 %s25, %s37
      %p123 = scmp.eq.s32.totalorder %s122, 0
      %s125 = sadd.s32 %s124, 1
      %s126 = scalar_select %p123, %s124, %s125
      %p129 = pneg %p123
      %p130 = scmp.eq.s32.totalorder %s18, 1
      %p131 = por %p129, %p130
      %p132 = scmp.ne.s32.totalorder %s124, %s127
      %p133 = scmp.eq.s32.totalorder %s18, 0
      %p134 = por %p132, %p133
      %p135 = scmp.ne.s32.totalorder %s124, %s127
      %p136 = scmp.eq.s32.totalorder %s23, 1
      %p137 = por %p135, %p136
      %p138 = scmp.ne.s32.totalorder %s127, %s128
      %p139 = scmp.eq.s32.totalorder %s23, 0
      %p140 = por %p138, %p139
      %p141 = scmp.ne.s32.totalorder %s127, %s128
      %p142 = scmp.eq.s32.totalorder %s24, 1
      %p143 = por %p141, %p142
      %p145 = scmp.ne.s32.totalorder %s128, %s144
      %p146 = scmp.eq.s32.totalorder %s24, 0
      %p147 = por %p145, %p146
      %p148 = scmp.le.s32.totalorder 1, %s18
      %p149 = scmp.lt.s32.totalorder %s18, 3
      %p150 = pnand %p148, %p149
      %p151 = pneg %p150
      // Predicated region
      $region9: #{tpu_custom_call.1} parent=5 // pred_check
        _
      $region10: #{tpu_custom_call.1} parent=5 // pred_check_branch
        %153 = sbr.rel (%p150) target = $region12
      $region11: #{tpu_custom_call.1} parent=5 // pred_region
        %s154 = ssub.s32 %s18, 1
      $region12: #{tpu_custom_call.1} parent=5 // pred_fallthru
        _
      %p155 = scmp.lt.s32.totalorder %s18, 2
      // Predicated region
      $region13: #{tpu_custom_call.1} parent=5 // pred_check
        %p156 = pneg %p155
      $region14: #{tpu_custom_call.1} parent=5 // pred_check_branch
        %158 = sbr.rel (%p156) target = $region16
      $region15: #{tpu_custom_call.1} parent=5 // pred_region
        // Predicated region
        $region17: #{tpu_custom_call.1} parent=15 // pred_check
          %p159 = pneg %p52
        $region18: #{tpu_custom_call.1} parent=15 // pred_check_branch
          %161 = sbr.rel (%p159) target = $region20
        $region19: #{tpu_custom_call.1} parent=15 // pred_region
          %s162 = sand.u32 %s42, 1
          %s163 = scalar_lea.sflag [#allocation3], %s162
          %s164 = sand.u32 %s42, 1
          %s165 = smul.addr %s164, 32
          %s166 = scalar_lea.vmem [#allocation2], %s165
          %s167 = smul.u32 8, %s26
          %s169 = ssub.s32 512, 512
          %170 = vsyncadd %s163, %s169
          %s171 = smul.addr %s25, 8
          %s172 = sadd.s32 %s167, %s171
          %s173 = smul.addr %s172, 64
          %s174 = scalar_lea.hbm %s0, %s173
          %s176 = sshll.u32 %s166, 4
          %s177 = int_to_ptr.vmem [resolvable:$true] %s176
          %179 = dma.hbm_to_vmem [thread:$0]  %s174, 512, %s177, %s163
        $region20: #{tpu_custom_call.1} parent=15 // pred_fallthru
          _
        // Predicated region
        $region21: #{tpu_custom_call.1} parent=15 // pred_check
          %p180 = pneg %p80
        $region22: #{tpu_custom_call.1} parent=15 // pred_check_branch
          %182 = sbr.rel (%p180) target = $region24
        $region23: #{tpu_custom_call.1} parent=15 // pred_region
          %s183 = sand.u32 %s18, 1
          %s184 = scalar_lea.sflag [#allocation6], %s183
          %s185 = sand.u32 %s70, 1
          %s186 = smul.addr %s185, 32
          %s187 = scalar_lea.vmem [#allocation5], %s186
          %s188 = smul.u32 8, %s26
          %s190 = ssub.s32 512, 512
          %191 = vsyncadd %s184, %s190
          %s192 = smul.addr %s25, 8
          %s193 = sadd.s32 %s188, %s192
          %s194 = smul.addr %s193, 64
          %s195 = scalar_lea.hbm %s1, %s194
          %s197 = sshll.u32 %s187, 4
          %s198 = int_to_ptr.vmem [resolvable:$true] %s197
          %200 = dma.hbm_to_vmem [thread:$0]  %s195, 512, %s198, %s184
        $region24: #{tpu_custom_call.1} parent=15 // pred_fallthru
          _
        // Predicated region
        $region25: #{tpu_custom_call.1} parent=15 // pred_check
          %p201 = pneg %p108
        $region26: #{tpu_custom_call.1} parent=15 // pred_check_branch
          %203 = sbr.rel (%p201) target = $region28
        $region27: #{tpu_custom_call.1} parent=15 // pred_region
          %s204 = sand.u32 %s18, 1
          %s205 = scalar_lea.sflag [#allocation6], %s204
          %s206 = sand.u32 %s98, 1
          %s207 = smul.addr %s206, 8
          %s208 = scalar_lea.vmem [#allocation7], %s207
          %s209 = smul.u32 8, %s26
          %s211 = ssub.s32 128, 128
          %212 = vsyncadd %s205, %s211
          %s213 = smul.addr %s25, 8
          %s214 = sadd.s32 %s209, %s213
          %s215 = smul.addr %s214, 16
          %s216 = scalar_lea.hbm %s2, %s215
          %s218 = sshll.u32 %s208, 4
          %s219 = int_to_ptr.vmem [resolvable:$true] %s218
          %221 = dma.hbm_to_vmem [thread:$0]  %s216, 128, %s219, %s205
        $region28: #{tpu_custom_call.1} parent=15 // pred_fallthru
          _
      $region16: #{tpu_custom_call.1} parent=5 // pred_fallthru
        _
      %p222 = scmp.le.s32.totalorder 1, %s18
      %p223 = scmp.lt.s32.totalorder %s18, 3
      %p224 = pnand %p222, %p223
      %p225 = pneg %p224
      // Predicated region
      $region29: #{tpu_custom_call.1} parent=5 // pred_check
        _
      $region30: #{tpu_custom_call.1} parent=5 // pred_check_branch
        %227 = sbr.rel (%p224) target = $region32
      $region31: #{tpu_custom_call.1} parent=5 // pred_region
        %s228 = ssub.s32 %s18, 1
        %s229 = sand.u32 %s45, 1
        %s230 = scalar_lea.sflag [#allocation3], %s229
        %s231 = sand.u32 %s45, 1
        %s232 = smul.addr %s231, 32
        %s233 = scalar_lea.vmem [#allocation2], %s232
        // Predicated region
        $region33: #{tpu_custom_call.1} parent=31 // pred_check
          %p234 = pneg %p58
        $region34: #{tpu_custom_call.1} parent=31 // pred_check_branch
          %236 = sbr.rel (%p234) target = $region36
        $region35: #{tpu_custom_call.1} parent=31 // pred_region
          %237 = dma.done %s230, 512
        $region36: #{tpu_custom_call.1} parent=31 // pred_fallthru
          _
        %s238 = sand.u32 %s23, 1
        %s239 = scalar_lea.sflag [#allocation6], %s238
        %s240 = sand.u32 %s73, 1
        %s241 = smul.addr %s240, 32
        %s242 = scalar_lea.vmem [#allocation5], %s241
        // Predicated region
        $region37: #{tpu_custom_call.1} parent=31 // pred_check
          %p243 = pneg %p86
        $region38: #{tpu_custom_call.1} parent=31 // pred_check_branch
          %245 = sbr.rel (%p243) target = $region40
        $region39: #{tpu_custom_call.1} parent=31 // pred_region
          %246 = dma.done %s239, 512
        $region40: #{tpu_custom_call.1} parent=31 // pred_fallthru
          _
        %s247 = sand.u32 %s23, 1
        %s248 = scalar_lea.sflag [#allocation6], %s247
        %s249 = sand.u32 %s101, 1
        %s250 = smul.addr %s249, 8
        %s251 = scalar_lea.vmem [#allocation7], %s250
        // Predicated region
        $region41: #{tpu_custom_call.1} parent=31 // pred_check
          %p252 = pneg %p114
        $region42: #{tpu_custom_call.1} parent=31 // pred_check_branch
          %254 = sbr.rel (%p252) target = $region44
        $region43: #{tpu_custom_call.1} parent=31 // pred_region
          %255 = dma.done %s248, 128
        $region44: #{tpu_custom_call.1} parent=31 // pred_fallthru
          _
        %s256 = sand.u32 %s45, 1
        %s257 = scalar_lea.sflag [#allocation3], %s256
        %s258 = sand.u32 %s45, 1
        %s259 = smul.addr %s258, 32
        %s260 = scalar_lea.vmem [#allocation2], %s259
        %p261 = pneg %p58
        %p262 = pneg %p55
        %s263 = sand.u32 %s23, 1
        %s264 = scalar_lea.sflag [#allocation6], %s263
        %s265 = sand.u32 %s73, 1
        %s266 = smul.addr %s265, 32
        %s267 = scalar_lea.vmem [#allocation5], %s266
        %p268 = pneg %p86
        %p269 = pneg %p83
        %s270 = sand.u32 %s23, 1
        %s271 = scalar_lea.sflag [#allocation6], %s270
        %s272 = sand.u32 %s101, 1
        %s273 = smul.addr %s272, 8
        %s274 = scalar_lea.vmem [#allocation7], %s273
        %p275 = pneg %p114
        %p276 = pneg %p111
        %p277 = pneg %p140
        %p278 = pneg %p137
        %s279 = sand.u32 %s127, 1
        %s280 = scalar_lea.sflag [#allocation4], %s279
        %s281 = sand.u32 %s127, 1
        %s282 = smul.addr %s281, 8
        %s283 = scalar_lea.vmem [#allocation8], %s282
        %s284 = smul.u32 8, %s28
        %s285 = smul.u32 8, %s28
        %s286 = smul.u32 8, %s28
        %p287 = scmp.eq.s32.totalorder %s28, 0
        // Predicated region
        $region45: #{tpu_custom_call.1} parent=31 // pred_check
          %p288 = pneg %p287
        $region46: #{tpu_custom_call.1} parent=31 // pred_check_branch
          %290 = sbr.rel (%p288) target = $region48
        $region47: #{tpu_custom_call.1} parent=31 // pred_region
          %291 = vst [vmem:[%s283] sm:$0xff] 0.0
        $region48: #{tpu_custom_call.1} parent=31 // pred_fallthru
          _
        %v292 = vld [vmem:[%s233] sm:$0xff]
        %v293 = vld [vmem:[%s233 + $0x8] sm:$0xff]
        %v294 = vld [vmem:[%s233 + $0x10] sm:$0xff]
        %v295 = vld [vmem:[%s233 + $0x18] sm:$0xff]
        %v296 = vld [vmem:[%s242] sm:$0xff]
        %v297 = vld [vmem:[%s242 + $0x8] sm:$0xff]
        %v298 = vld [vmem:[%s242 + $0x10] sm:$0xff]
        %v299 = vld [vmem:[%s242 + $0x18] sm:$0xff]
        %v300 = vld [vmem:[%s251] sm:$0xff]
        %v301 = vsub.f32 %v292, %v296
        %v302 = vsub.f32 %v293, %v297
        %v303 = vsub.f32 %v294, %v298
        %v304 = vsub.f32 %v295, %v299
        %v306 = vlaneseq
        %v307 = vshrl.u32 %v306, 7
        %v308 = vsub.s32 0, %v307
        %v309 = vrot.slane %v300, %v308
        %v310 = vlaneseq
        %v311 = vshrl.u32 %v310, 7
        %v312 = vsub.s32 1, %v311
        %v313 = vrot.slane %v300, %v312
        %v314 = vlaneseq
        %v315 = vshrl.u32 %v314, 7
        %v316 = vsub.s32 2, %v315
        %v317 = vrot.slane %v300, %v316
        %v318 = vlaneseq
        %v319 = vshrl.u32 %v318, 7
        %v320 = vsub.s32 3, %v319
        %v321 = vrot.slane %v300, %v320
        %v322 = vlaneseq
        %v323 = vshrl.u32 %v322, 7
        %v324 = vsub.s32 4, %v323
        %v325 = vrot.slane %v300, %v324
        %v326 = vlaneseq
        %v327 = vshrl.u32 %v326, 7
        %v328 = vsub.s32 5, %v327
        %v329 = vrot.slane %v300, %v328
        %v330 = vlaneseq
        %v331 = vshrl.u32 %v330, 7
        %v332 = vsub.s32 6, %v331
        %v333 = vrot.slane %v300, %v332
        %v334 = vlaneseq
        %v335 = vshrl.u32 %v334, 7
        %v336 = vsub.s32 7, %v335
        %v337 = vrot.slane %v300, %v336
        %v338 = vcombine.low %v309, %v313
        %v339 = vcombine.low %v317, %v321
        %v340 = vcombine.low %v325, %v329
        %v341 = vcombine.low %v333, %v337
        %v346 = vmul.f32 %v301, %v338
        %v347 = vmul.f32 %v302, %v339
        %v348 = vmul.f32 %v303, %v340
        %v349 = vmul.f32 %v304, %v341
        %v350 = vand.u32 2147483647, %v346
        %v351 = vand.u32 2147483647, %v347
        %v352 = vand.u32 2147483647, %v348
        %v353 = vand.u32 2147483647, %v349
        %v355 = vrot.slane %v350, 4
        %v358 = vrot.slane %v351, 4
        %v361 = vrot.slane %v352, 4
        %v364 = vrot.slane %v353, 4
        %v366 = vcombine.low %v350, %v351
        %v368 = vunpack.c.l.s4 1983009808
        %v369 = vunpack.c.0.s8 %v368
        %v370 = vlaneseq
        %v371 = vshrl.u32 %v370, 7
        %v372 = vsub.s32 %v369, %v371
        %v373 = vrot.slane %v366, %v372
        %v374 = vcombine.low %v355, %v358
        %v376 = vunpack.c.l.s4 1983009808
        %v377 = vunpack.c.0.s8 %v376
        %v378 = vlaneseq
        %v379 = vshrl.u32 %v378, 7
        %v380 = vsub.s32 %v377, %v379
        %v381 = vrot.slane %v374, %v380
        %v382 = vcombine.low %v373, %v381
        %v383 = vcombine.high %v373, %v381
        %v385 = vunpack.c.l.s4 1934713408
        %v386 = vunpack.c.0.s8 %v385
        %v387 = vlaneseq
        %v388 = vshrl.u32 %v387, 7
        %v389 = vsub.s32 %v386, %v388
        %v390 = vrot.slane %v382, %v389
        %v392 = vunpack.c.l.s4 1934713408
        %v393 = vunpack.c.0.s8 %v392
        %v394 = vlaneseq
        %v395 = vshrl.u32 %v394, 7
        %v396 = vsub.s32 %v393, %v395
        %v397 = vrot.slane %v383, %v396
        %v398 = vcombine.high %v390, 0.0
        %v399 = vcombine.high %v397, 0.0
        %v400 = vcombine.low %v352, %v353
        %v402 = vunpack.c.l.s4 1983009808
        %v403 = vunpack.c.0.s8 %v402
        %v404 = vlaneseq
        %v405 = vshrl.u32 %v404, 7
        %v406 = vsub.s32 %v403, %v405
        %v407 = vrot.slane %v400, %v406
        %v408 = vcombine.low %v361, %v364
        %v410 = vunpack.c.l.s4 1983009808
        %v411 = vunpack.c.0.s8 %v410
        %v412 = vlaneseq
        %v413 = vshrl.u32 %v412, 7
        %v414 = vsub.s32 %v411, %v413
        %v415 = vrot.slane %v408, %v414
        %v416 = vcombine.low %v407, %v415
        %v417 = vcombine.high %v407, %v415
        %v419 = vunpack.c.l.s4 1934713408
        %v420 = vunpack.c.0.s8 %v419
        %v421 = vlaneseq
        %v422 = vshrl.u32 %v421, 7
        %v423 = vsub.s32 %v420, %v422
        %v424 = vrot.slane %v416, %v423
        %v426 = vunpack.c.l.s4 1934713408
        %v427 = vunpack.c.0.s8 %v426
        %v428 = vlaneseq
        %v429 = vshrl.u32 %v428, 7
        %v430 = vsub.s32 %v427, %v429
        %v431 = vrot.slane %v417, %v430
        %v432 = vcombine.high %v424, 0.0
        %v433 = vcombine.high %v431, 0.0
        %v442 = vcombine.low %v390, %v424
        %v443 = vcombine.low %v398, %v432
        %v444 = vcombine.low %v397, %v431
        %v445 = vcombine.low %v399, %v433
        %v450 = vadd.f32 %v442, %v443
        %v451 = vadd.f32 %v450, %v444
        %v452 = vadd.f32 %v451, %v445
        %v453 = vld [vmem:[%s283] sm:$0xff]
        %v454 = vadd.f32 %v453, %v452
        %455 = vst [vmem:[%s283] sm:$0xff] %v454
        %s456 = sand.u32 %s127, 1
        %s457 = scalar_lea.sflag [#allocation4], %s456
        %s458 = sand.u32 %s127, 1
        %s459 = smul.addr %s458, 8
        %s460 = scalar_lea.vmem [#allocation8], %s459
        // Predicated region
        $region49: #{tpu_custom_call.1} parent=31 // pred_check
          %p461 = pneg %p137
        $region50: #{tpu_custom_call.1} parent=31 // pred_check_branch
          %463 = sbr.rel (%p461) target = $region52
        $region51: #{tpu_custom_call.1} parent=31 // pred_region
          %s465 = ssub.s32 128, 128
          %466 = vsyncadd %s457, %s465
          %s467 = smul.addr %s27, 128
          %s468 = scalar_lea.hbm %s3, %s467
          %s470 = sshll.u32 %s460, 4
          %s471 = int_to_ptr.vmem [resolvable:$true] %s470
          %473 = dma.vmem_to_hbm [thread:$0]  %s471, 128, %s468, %s457
        $region52: #{tpu_custom_call.1} parent=31 // pred_fallthru
          _
      $region32: #{tpu_custom_call.1} parent=5 // pred_fallthru
        _
      %p474 = scmp.le.s32.totalorder 2, %s18
      // Predicated region
      $region53: #{tpu_custom_call.1} parent=5 // pred_check
        %p475 = pneg %p474
      $region54: #{tpu_custom_call.1} parent=5 // pred_check_branch
        %477 = sbr.rel (%p475) target = $region56
      $region55: #{tpu_custom_call.1} parent=5 // pred_region
        %s478 = ssub.s32 %s18, 2
        // Predicated region
        $region57: #{tpu_custom_call.1} parent=55 // pred_check
          %p479 = pneg %p143
        $region58: #{tpu_custom_call.1} parent=55 // pred_check_branch
          %481 = sbr.rel (%p479) target = $region60
        $region59: #{tpu_custom_call.1} parent=55 // pred_region
          %s482 = sand.u32 %s128, 1
          %s483 = scalar_lea.sflag [#allocation4], %s482
          %s484 = sand.u32 %s128, 1
          %s485 = smul.addr %s484, 8
          %s486 = scalar_lea.vmem [#allocation8], %s485
          %487 = dma.done %s483, 128
        $region60: #{tpu_custom_call.1} parent=55 // pred_fallthru
          _
      $region56: #{tpu_custom_call.1} parent=5 // pred_fallthru
        _
    $region6: #{tpu_custom_call.1} parent=1 // loop_footer
      %s22 = sadd.s32 1, %s18
    $region7: #{tpu_custom_call.1} parent=1 // loop_footer_branch
      %17 = sbr.rel target = $region3
    $region8: #{tpu_custom_call.1} parent=1 // loop_exit
      _
    %488 = vsyncpa [#allocation3], 1
    %s489 = scalar_lea.sflag [#allocation3], 1
    %490 = vsyncpa %s489, 1
    %491 = vsyncpa [#allocation6], 1
    %s492 = scalar_lea.sflag [#allocation6], 1
    %493 = vsyncpa %s492, 1
    %494 = vsyncpa [#allocation4], 1
    %s495 = scalar_lea.sflag [#allocation4], 1
    %496 = vsyncpa %s495, 1

</llo_original>
